<compile_context>
chip_gen: v6e
topology: v6e:2x2x1
jax: 0.10.0
libtpu: 0.0.40
codegen_flags: <defaults>
</compile_context>

<pallas_src>
import functools

import jax
import jax.numpy as jnp
from jax import lax
from jax.experimental import pallas as pl
from jax.experimental.pallas import tpu as pltpu


def _cdiv(a, b):
    return (a + b - 1) // b


def _round_up(n, m):
    return _cdiv(n, m) * m


def _finish(h1_pre, b1_ref, w2_ref, b2_ref, w3_ref, b3_ref, o_ref):
    """Shared tail: bias+ReLU, layer 2, bias+ReLU, H->1 layer on VPU+XLU, store."""
    h1 = jnp.maximum(h1_pre + b1_ref[...], 0.0)                       # (H, tm) f32
    h2 = jnp.dot(w2_ref[...], h1.astype(w2_ref.dtype),
                 preferred_element_type=jnp.float32) + b2_ref[...]    # (H, tm) f32
    h2 = jnp.maximum(h2, 0.0)
    # Final H->1 layer on VPU (elementwise mul) + XLU (sublane reduce): avoids a
    # wasteful single-column MXU pass and keeps the result lane-dense. All f32.
    out = jnp.sum(h2 * w3_ref[...], axis=0, keepdims=True) + b3_ref[0]  # (1, tm)
    o_ref[...] = out.astype(o_ref.dtype)


def _mlp_kernel_xt(xt_ref, w1_ref, b1_ref, w2_ref, b2_ref, w3_ref, b3_ref, o_ref):
    # Transposed-input path: xt tile is (F, tm), batch already on the lane axis.
    h1_pre = jnp.dot(w1_ref[...], xt_ref[...], preferred_element_type=jnp.float32)
    _finish(h1_pre, b1_ref, w2_ref, b2_ref, w3_ref, b3_ref, o_ref)


def _mlp_kernel_xm(x_ref, w1_ref, b1_ref, w2_ref, b2_ref, w3_ref, b3_ref, o_ref):
    # Batch-major path: x tile is (tm, F). Contract the F axes directly so the
    # MXU consumes the NT orientation without a physical transpose; the result
    # (H, tm) puts the batch on lanes for the rest of the kernel.
    h1_pre = lax.dot_general(
        w1_ref[...], x_ref[...],
        dimension_numbers=(((1,), (1,)), ((), ())),
        preferred_element_type=jnp.float32)
    _finish(h1_pre, b1_ref, w2_ref, b2_ref, w3_ref, b3_ref, o_ref)


def _select_tm(B, *, cap=2048, split_threshold=1024):
    """Balanced batch tile (multiple of 128).

    - keeps tiles <= cap,
    - balances the steps (no near-empty last tile),
    - forces >= 2 steps once the batch is big enough that per-step overhead
      (~0.35us) stops dominating, so v7x's two TensorCores both get work and
      the x DMA overlaps compute.
    """
    B_lane = _round_up(B, 128)
    n_steps = _cdiv(B_lane, cap)
    if B_lane >= split_threshold:
        n_steps = max(n_steps, 2)
    return _round_up(_cdiv(B_lane, n_steps), 128)


@functools.partial(jax.jit, static_argnames=("tm", "input_dtype", "transpose_input"))
def fully_connected_forward(x, params, *, tm=None, input_dtype=None,
                            transpose_input=None):
    """Run the FullyConnected MLP with a fused Pallas TPU kernel.

    x:      (B, n_feature) float32
    params: dict with
      w1 (H, F), b1 (H, 1)   -- PyTorch Linear.weight layout, bias as column
      w2 (H, H), b2 (H, 1)
      w3 (H, 1), b3 (1, 1)   -- final layer weight stored as a column
    input_dtype: optional narrow dtype (e.g. jnp.bfloat16) for x/w1/w2; matmul
      accumulation and all post-matmul arithmetic stay in f32.
    returns (B, 1) float32
    """
    w1, b1 = params["w1"], params["b1"]
    w2, b2 = params["w2"], params["b2"]
    w3, b3 = params["w3"], params["b3"]

    B, F = x.shape

    if tm is None:
        tm = _select_tm(B)
    if tm % 128 != 0:
        raise ValueError(f"tm must be a multiple of 128 lanes, got {tm}")
    B_pad = _round_up(B, tm)
    grid = (B_pad // tm,)

    if transpose_input is None:
        # Small batches: (tm, F<=~16) blocks are lane-sparse, so present an
        # explicitly transposed (F, tm) slab. Large batches: skip the wrapper
        # x.T (a separate un-hidden HBM read+write of the dominant stream).
        transpose_input = B_pad < 1024

    if input_dtype is not None:
        cd = jnp.dtype(input_dtype)
        x = x.astype(cd)
        w1 = w1.astype(cd)
        w2 = w2.astype(cd)

    # Biases / final weight stay f32 (f32 bias add / ReLU / VPU reduce; v5e has
    # no bf16 VPU path). b3 is a single scalar -> SMEM.
    b1 = b1.astype(jnp.float32)
    b2 = b2.astype(jnp.float32)
    w3 = w3.astype(jnp.float32)
    b3_flat = b3.reshape((1,)).astype(jnp.float32)

    # Tiny weights/biases stay resident across grid steps (index map is constant).
    def resident(a):
        return pl.BlockSpec(a.shape, lambda i, _nd=a.ndim: (0,) * _nd)

    if transpose_input:
        xin = x.T                               # (F, B), batch on lanes
        if B_pad != B:
            xin = jnp.pad(xin, ((0, 0), (0, B_pad - B)))
        x_spec = pl.BlockSpec((F, tm), lambda i: (0, i))
        kernel = _mlp_kernel_xt
    else:
        xin = x                                 # (B, F), batch-major, no transpose pass
        if B_pad != B:
            xin = jnp.pad(xin, ((0, B_pad - B), (0, 0)))
        x_spec = pl.BlockSpec((tm, F), lambda i: (i, 0))
        kernel = _mlp_kernel_xm

    out_t = pl.pallas_call(
        kernel,
        out_shape=jax.ShapeDtypeStruct((1, B_pad), jnp.float32),
        grid_spec=pltpu.PrefetchScalarGridSpec(
            num_scalar_prefetch=0,
            grid=grid,
            in_specs=[
                x_spec,
                resident(w1),
                resident(b1),
                resident(w2),
                resident(b2),
                resident(w3),
                pl.BlockSpec(memory_space=pltpu.MemorySpace.SMEM),  # b3 scalar
            ],
            out_specs=pl.BlockSpec((1, tm), lambda i: (0, i)),       # lane-dense out
        ),
        compiler_params=pltpu.CompilerParams(
            dimension_semantics=("parallel",),
            vmem_limit_bytes=32 * 1024 * 1024,
        ),
    )(xin, w1, b1, w2, b2, w3, b3_flat)

    # Padded batch columns are garbage-but-finite and sliced off here.
    return out_t[:, :B].reshape(B, 1)


def init_params(key, n_feature, n_hidden):
    """Deterministic init matching PyTorch nn.Linear's U(-1/sqrt(fan_in), 1/sqrt(fan_in)).

    Layout (kernel-friendly, batch-on-lanes orientation):
      w1: (H, F)  == PyTorch Linear.weight       b1: (H, 1)
      w2: (H, H)  == PyTorch Linear.weight       b2: (H, 1)
      w3: (H, 1)  == PyTorch Linear.weight.T     b3: (1, 1)
    """
    ks = jax.random.split(key, 6)

    def linear(kw, kb, fan_in, fan_out):
        bound = 1.0 / jnp.sqrt(float(fan_in))
        w = jax.random.uniform(kw, (fan_out, fan_in), jnp.float32, -bound, bound)
        b = jax.random.uniform(kb, (fan_out, 1), jnp.float32, -bound, bound)
        return w, b

    w1, b1 = linear(ks[0], ks[1], n_feature, n_hidden)
    w2, b2 = linear(ks[2], ks[3], n_hidden, n_hidden)
    w3t, b3 = linear(ks[4], ks[5], n_hidden, 1)     # w3t: (1, H)
    return dict(w1=w1, b1=b1, w2=w2, b2=b2, w3=w3t.T, b3=b3)


def reference_forward(x, p):
    h1 = jnp.maximum(x @ p["w1"].T + p["b1"].T, 0.0)
    h2 = jnp.maximum(h1 @ p["w2"].T + p["b2"].T, 0.0)
    return h2 @ p["w3"] + p["b3"]


if __name__ == "__main__":
    key = jax.random.PRNGKey(0)
    k_x, k_p, k_x2 = jax.random.split(key, 3)

    n_feature, n_hidden = 16, 32
    params = init_params(k_p, n_feature, n_hidden)

    # 1) Small batch: transposed (batch-on-lanes) path, single grid step.
    x_small = jax.random.normal(k_x, (128, n_feature), jnp.float32)
    out_small = jax.block_until_ready(fully_connected_forward(x_small, params))
    ref_small = reference_forward(x_small, params)
    assert out_small.shape == (128, 1)
    assert jnp.allclose(out_small, ref_small, atol=1e-4, rtol=1e-4), "small-batch mismatch"

    # 2) Larger, non-tile-multiple batch: batch-major path (no wrapper x.T HBM
    #    pass), balanced 2-step grid (tm=640) -> both v7x TCs + DMA/compute overlap.
    x_big = jax.random.normal(k_x2, (1200, n_feature), jnp.float32)
    out_big = jax.block_until_ready(fully_connected_forward(x_big, params))
    ref_big = reference_forward(x_big, params)
    assert out_big.shape == (1200, 1)
    assert jnp.allclose(out_big, ref_big, atol=1e-4, rtol=1e-4), "big-batch mismatch"

    # 3) bf16 input/weight stream (halves the dominant x HBM bytes on v6e/v7x);
    #    accumulation and post-matmul math stay f32, so only bf16-level error.
    out_bf16 = jax.block_until_ready(
        fully_connected_forward(x_big, params, input_dtype=jnp.bfloat16))
    assert out_bf16.shape == (1200, 1)
    assert jnp.allclose(out_bf16, ref_big, atol=1e-1, rtol=1e-1), "bf16 mismatch"

    print("KERNEL_OK")
</pallas_src>

<mosaic_0001>
module attributes {stable_mosaic.version = 11 : i64} {
  func.func @_mlp_kernel_xt(%arg0: i32, %arg1: memref<16x128xf32, #tpu.memory_space<vmem>>, %arg2: memref<32x16xf32, #tpu.memory_space<vmem>>, %arg3: memref<32x1xf32, #tpu.memory_space<vmem>>, %arg4: memref<32x32xf32, #tpu.memory_space<vmem>>, %arg5: memref<32x1xf32, #tpu.memory_space<vmem>>, %arg6: memref<32x1xf32, #tpu.memory_space<vmem>>, %arg7: memref<1xf32, #tpu.memory_space<smem>>, %arg8: memref<1x128xf32, #tpu.memory_space<vmem>>) attributes {dimension_semantics = [#tpu.dimension_semantics<parallel>], iteration_bounds = array<i64: 1>, scalar_prefetch = 0 : i64, scratch_operands = 0 : i64, tpu.core_type = #tpu.core_type<tc>, window_params = [{transform_indices = @transform_0, window_bounds = array<i64: 16, 128>}, {pipeline_mode = #tpu.pipeline_mode<synchronous>, transform_indices = @transform_1, window_bounds = array<i64: 32, 16>}, {pipeline_mode = #tpu.pipeline_mode<synchronous>, transform_indices = @transform_2, window_bounds = array<i64: 32, 1>}, {pipeline_mode = #tpu.pipeline_mode<synchronous>, transform_indices = @transform_3, window_bounds = array<i64: 32, 32>}, {pipeline_mode = #tpu.pipeline_mode<synchronous>, transform_indices = @transform_4, window_bounds = array<i64: 32, 1>}, {pipeline_mode = #tpu.pipeline_mode<synchronous>, transform_indices = @transform_5, window_bounds = array<i64: 32, 1>}, {transform_indices = @transform_6, window_bounds = array<i64: 1>}, {transform_indices = @transform_7, window_bounds = array<i64: 1, 128>}]} {
    %c0 = arith.constant 0 : index
    %c0_0 = arith.constant 0 : index
    %0 = vector.load %arg2[%c0, %c0_0] : memref<32x16xf32, #tpu.memory_space<vmem>>, vector<32x16xf32>
    %c0_1 = arith.constant 0 : index
    %c0_2 = arith.constant 0 : index
    %1 = vector.load %arg1[%c0_1, %c0_2] : memref<16x128xf32, #tpu.memory_space<vmem>>, vector<16x128xf32>
    %cst = arith.constant dense<0.000000e+00> : vector<32x128xf32>
    %2 = tpu.matmul %0, %1, %cst {dimension_numbers = #tpu.dot_dimension_numbers<[1], [0], [0], [1], [0, 0, 1, 1], [], []>} : vector<32x16xf32>, vector<16x128xf32>, vector<32x128xf32> -> vector<32x128xf32>
    %c0_3 = arith.constant 0 : index
    %c0_4 = arith.constant 0 : index
    %3 = vector.load %arg3[%c0_3, %c0_4] : memref<32x1xf32, #tpu.memory_space<vmem>>, vector<32x1xf32>
    %4 = vector.broadcast %3 : vector<32x1xf32> to vector<32x128xf32>
    %5 = arith.addf %2, %4 : vector<32x128xf32>
    %cst_5 = arith.constant 0.000000e+00 : f32
    %6 = vector.broadcast %cst_5 : f32 to vector<32x128xf32>
    %7 = arith.maximumf %5, %6 : vector<32x128xf32>
    %c0_6 = arith.constant 0 : index
    %c0_7 = arith.constant 0 : index
    %8 = vector.load %arg4[%c0_6, %c0_7] : memref<32x32xf32, #tpu.memory_space<vmem>>, vector<32x32xf32>
    %cst_8 = arith.constant dense<0.000000e+00> : vector<32x128xf32>
    %9 = tpu.matmul %8, %7, %cst_8 {dimension_numbers = #tpu.dot_dimension_numbers<[1], [0], [0], [1], [0, 0, 1, 1], [], []>} : vector<32x32xf32>, vector<32x128xf32>, vector<32x128xf32> -> vector<32x128xf32>
    %c0_9 = arith.constant 0 : index
    %c0_10 = arith.constant 0 : index
    %10 = vector.load %arg5[%c0_9, %c0_10] : memref<32x1xf32, #tpu.memory_space<vmem>>, vector<32x1xf32>
    %11 = vector.broadcast %10 : vector<32x1xf32> to vector<32x128xf32>
    %12 = arith.addf %9, %11 : vector<32x128xf32>
    %cst_11 = arith.constant 0.000000e+00 : f32
    %13 = vector.broadcast %cst_11 : f32 to vector<32x128xf32>
    %14 = arith.maximumf %12, %13 : vector<32x128xf32>
    %c0_12 = arith.constant 0 : index
    %c0_13 = arith.constant 0 : index
    %15 = vector.load %arg6[%c0_12, %c0_13] : memref<32x1xf32, #tpu.memory_space<vmem>>, vector<32x1xf32>
    %16 = vector.broadcast %15 : vector<32x1xf32> to vector<32x128xf32>
    %17 = arith.mulf %14, %16 : vector<32x128xf32>
    %cst_14 = arith.constant dense<0.000000e+00> : vector<128xf32>
    %18 = vector.multi_reduction <add>, %17, %cst_14 [0] : vector<32x128xf32> to vector<128xf32>
    %19 = vector.shape_cast %18 : vector<128xf32> to vector<1x128xf32>
    %c0_15 = arith.constant 0 : index
    %20 = memref.load %arg7[%c0_15] : memref<1xf32, #tpu.memory_space<smem>>
    %21 = vector.broadcast %20 : f32 to vector<1x128xf32>
    %22 = arith.addf %19, %21 : vector<1x128xf32>
    %c0_16 = arith.constant 0 : index
    %c0_17 = arith.constant 0 : index
    %23 = vector.load %arg8[%c0_16, %c0_17] : memref<1x128xf32, #tpu.memory_space<vmem>>, vector<1x128xf32>
    tpu.vector_store %arg8[%c0_16, %c0_17], %22 {strides = array<i32>} : memref<1x128xf32, #tpu.memory_space<vmem>>, vector<1x128xf32>,
    return
  }
  func.func @transform_0(%arg0: i32) -> (i32, i32) {
    %c0_i32 = arith.constant 0 : i32
    %c0_i32_0 = arith.constant 0 : i32
    return %c0_i32, %arg0 : i32, i32
  }
  func.func @transform_1(%arg0: i32) -> (i32, i32) {
    %c0_i32 = arith.constant 0 : i32
    %c0_i32_0 = arith.constant 0 : i32
    %c0_i32_1 = arith.constant 0 : i32
    return %c0_i32, %c0_i32_0 : i32, i32
  }
  func.func @transform_2(%arg0: i32) -> (i32, i32) {
    %c0_i32 = arith.constant 0 : i32
    %c0_i32_0 = arith.constant 0 : i32
    %c0_i32_1 = arith.constant 0 : i32
    return %c0_i32, %c0_i32_0 : i32, i32
  }
  func.func @transform_3(%arg0: i32) -> (i32, i32) {
    %c0_i32 = arith.constant 0 : i32
    %c0_i32_0 = arith.constant 0 : i32
    %c0_i32_1 = arith.constant 0 : i32
    return %c0_i32, %c0_i32_0 : i32, i32
  }
  func.func @transform_4(%arg0: i32) -> (i32, i32) {
    %c0_i32 = arith.constant 0 : i32
    %c0_i32_0 = arith.constant 0 : i32
    %c0_i32_1 = arith.constant 0 : i32
    return %c0_i32, %c0_i32_0 : i32, i32
  }
  func.func @transform_5(%arg0: i32) -> (i32, i32) {
    %c0_i32 = arith.constant 0 : i32
    %c0_i32_0 = arith.constant 0 : i32
    %c0_i32_1 = arith.constant 0 : i32
    return %c0_i32, %c0_i32_0 : i32, i32
  }
  func.func @transform_6(%arg0: i32) -> i32 {
    %c0_i32 = arith.constant 0 : i32
    %c0_i32_0 = arith.constant 0 : i32
    return %c0_i32 : i32
  }
  func.func @transform_7(%arg0: i32) -> (i32, i32) {
    %c0_i32 = arith.constant 0 : i32
    %c0_i32_0 = arith.constant 0 : i32
    return %c0_i32, %arg0 : i32, i32
  }
}

</mosaic_0001>

<llo_original>
// kernel: fully_connected_forward.1
$region0: #{fully_connected_forward.1}
  #allocation0 [shape = 'u32[]', space=smem, size = 0x4, offset = 0x4, fixed_abs, tag = 'smem constant byte address 0x4 - core index']
  #allocation1 [shape = 'u32[144,128]{1,0:T(1,128)}', space=vmem, size = 0x12000, scoped, tag = 'internal scratch']
  #allocation2 [shape = 'f32[1]{0:T(128)S(6)}', space=smem, size = 0x200, scoped, tag = 'scoped memory for fully_connected_forward.1']
  %s0 = inlined_call_operand.vmem [shape: f32[16,128], index: 0, kind: input, shape index: {}]
  %s1 = inlined_call_operand.vmem [shape: f32[32,16], index: 1, kind: input, shape index: {}]
  %s2 = inlined_call_operand.vmem [shape: f32[32,1], index: 2, kind: input, shape index: {}]
  %s3 = inlined_call_operand.vmem [shape: f32[32,32], index: 3, kind: input, shape index: {}]
  %s4 = inlined_call_operand.vmem [shape: f32[32,1], index: 4, kind: input, shape index: {}]
  %s5 = inlined_call_operand.vmem [shape: f32[32,1], index: 5, kind: input, shape index: {}]
  %s6 = inlined_call_operand.<no memory space> [shape: f32[1], index: 6, kind: input, shape index: {}]
  %s7 = inlined_call_operand.hbm [shape: f32[1,128], index: 7, kind: output, shape index: {}]
  %s8 = sld [smem:[#allocation0]]
  $region38: #{fully_connected_forward.1} parent=0
    _
  %s10 = ssub.s32 1, %s8
  %s11 = scalar_select 0, %s10, %s8
  %12 = sst [smem:[#allocation2]] %s6
  $region1: #{fully_connected_forward.1} parent=0
    #allocation3 [shape = 'u8[512]{0}', space=vmem, size = 0x400, scoped, tag = 'output window, operand 0, single buffered']
    #allocation4 [shape = 's32[1]{0}', space=sflag, size = 0x4, scoped, tag = 'scoped memory for fully_connected_forward.1']
    %13 = vsyncpa [#allocation4], 0
    // Predicated region
    $region2: #{fully_connected_forward.1} parent=1 // pred_check
      _
    $region3: #{fully_connected_forward.1} parent=1 // pred_check_branch
      %15 = sbr.rel (0) target = $region5
    $region4: #{fully_connected_forward.1} parent=1 // pred_region
      _
    $region5: #{fully_connected_forward.1} parent=1 // pred_fallthru
      _
    // Predicated region
    $region6: #{fully_connected_forward.1} parent=1 // pred_check
      _
    $region7: #{fully_connected_forward.1} parent=1 // pred_check_branch
      %17 = sbr.rel (0) target = $region9
    $region8: #{fully_connected_forward.1} parent=1 // pred_region
      _
    $region9: #{fully_connected_forward.1} parent=1 // pred_fallthru
      _
    // Predicated region
    $region10: #{fully_connected_forward.1} parent=1 // pred_check
      _
    $region11: #{fully_connected_forward.1} parent=1 // pred_check_branch
      %19 = sbr.rel (0) target = $region13
    $region12: #{fully_connected_forward.1} parent=1 // pred_region
      _
    $region13: #{fully_connected_forward.1} parent=1 // pred_fallthru
      _
    // Predicated region
    $region14: #{fully_connected_forward.1} parent=1 // pred_check
      _
    $region15: #{fully_connected_forward.1} parent=1 // pred_check_branch
      %21 = sbr.rel (0) target = $region17
    $region16: #{fully_connected_forward.1} parent=1 // pred_region
      _
    $region17: #{fully_connected_forward.1} parent=1 // pred_fallthru
      _
    // Predicated region
    $region18: #{fully_connected_forward.1} parent=1 // pred_check
      _
    $region19: #{fully_connected_forward.1} parent=1 // pred_check_branch
      %23 = sbr.rel (0) target = $region21
    $region20: #{fully_connected_forward.1} parent=1 // pred_region
      _
    $region21: #{fully_connected_forward.1} parent=1 // pred_fallthru
      _
    // Predicated region
    $region22: #{fully_connected_forward.1} parent=1 // pred_check
      _
    $region23: #{fully_connected_forward.1} parent=1 // pred_check_branch
      %25 = sbr.rel (0) target = $region25
    $region24: #{fully_connected_forward.1} parent=1 // pred_region
      _
    $region25: #{fully_connected_forward.1} parent=1 // pred_fallthru
      _
    // Predicated region
    $region26: #{fully_connected_forward.1} parent=1 // pred_check
      _
    $region27: #{fully_connected_forward.1} parent=1 // pred_check_branch
      %27 = sbr.rel (0) target = $region29
    $region28: #{fully_connected_forward.1} parent=1 // pred_region
      _
    $region29: #{fully_connected_forward.1} parent=1 // pred_fallthru
      _
    %v28 = vld [vmem:[%s1] sm:$0xff]
    %v29 = vld [vmem:[%s1 + $0x8] sm:$0xff]
    %v30 = vld [vmem:[%s1 + $0x10] sm:$0xff]
    %v31 = vld [vmem:[%s1 + $0x18] sm:$0xff]
    %v32 = vld [vmem:[%s0] sm:$0xff]
    %v33 = vld [vmem:[%s0 + $0x8] sm:$0xff]
    %v34 = vld [vmem:[%s2] sm:$0xff]
    %v35 = vld [vmem:[%s2 + $0x8] sm:$0xff]
    %v36 = vld [vmem:[%s2 + $0x10] sm:$0xff]
    %v37 = vld [vmem:[%s2 + $0x18] sm:$0xff]
    %39 = vset.pattern.permute.xlu0 0
    %40 = vperm.xlu0 %39, %v34
    %v41 = vpop.permute.xlu0 %40
    %44 = vset.pattern.permute.xlu0 0
    %45 = vperm.xlu0 %44, %v35
    %v46 = vpop.permute.xlu0 %45
    %49 = vset.pattern.permute.xlu0 0
    %50 = vperm.xlu0 %49, %v36
    %v51 = vpop.permute.xlu0 %50
    %54 = vset.pattern.permute.xlu0 0
    %55 = vperm.xlu0 %54, %v37
    %v56 = vpop.permute.xlu0 %55
    %vm58 = vcmask 130048
    %v60 = vsel %vm58, %v28, 0
    %v63 = vsel %vm58, %v29, 0
    %v66 = vsel %vm58, %v30, 0
    %v69 = vsel %vm58, %v31, 0
    %71 = vmatprep.subr.mxu0 0.0
    %72 = vmatpush1.msra.mxu0 0.0
    %73 = vmatprep.subr.mxu0 0.0
    %74 = vmatpush1.msra.mxu0 0.0
    %75 = vmatprep.subr.mxu0 0.0
    %76 = vmatpush1.msra.mxu0 0.0
    %77 = vmatprep.subr.mxu0 0.0
    %78 = vmatpush1.msra.mxu0 0.0
    %79 = vmatprep.subr.mxu0 0.0
    %80 = vmatpush1.msra.mxu0 0.0
    %81 = vmatprep.subr.mxu0 0.0
    %82 = vmatpush1.msra.mxu0 0.0
    %83 = vmatprep.subr.mxu0 0.0
    %84 = vmatpush1.msra.mxu0 0.0
    %85 = vmatprep.subr.mxu0 0.0
    %86 = vmatpush1.msra.mxu0 0.0
    %87 = vmatprep.subr.mxu0 0.0
    %88 = vmatpush1.msra.mxu0 0.0
    %89 = vmatprep.subr.mxu0 0.0
    %90 = vmatpush1.msra.mxu0 0.0
    %91 = vmatprep.subr.mxu0 0.0
    %92 = vmatpush1.msra.mxu0 0.0
    %93 = vmatprep.subr.mxu0 0.0
    %94 = vmatpush1.msra.mxu0 0.0
    %95 = vmatprep.subr.mxu0 0.0
    %96 = vmatpush1.msra.mxu0 0.0
    %97 = vmatprep.subr.mxu0 0.0
    %98 = vmatpush1.msra.mxu0 0.0
    %99 = vmatprep.subr.mxu0 0.0
    %100 = vmatpush1.msra.mxu0 %v33
    %101 = vmatprep.subr.mxu0 0.0
    %102 = vmatpush1.msra.mxu0 %v32
    %103 = vmatprep.subr.mxu0 0.0
    %104 = vmatpush2.msra.mxu0 0.0
    %105 = vmatprep.subr.mxu0 0.0
    %106 = vmatpush2.msra.mxu0 0.0
    %107 = vmatprep.subr.mxu0 0.0
    %108 = vmatpush2.msra.mxu0 0.0
    %109 = vmatprep.subr.mxu0 0.0
    %110 = vmatpush2.msra.mxu0 0.0
    %111 = vmatprep.subr.mxu0 0.0
    %112 = vmatpush2.msra.mxu0 0.0
    %113 = vmatprep.subr.mxu0 0.0
    %114 = vmatpush2.msra.mxu0 0.0
    %115 = vmatprep.subr.mxu0 0.0
    %116 = vmatpush2.msra.mxu0 0.0
    %117 = vmatprep.subr.mxu0 0.0
    %118 = vmatpush2.msra.mxu0 0.0
    %119 = vmatprep.subr.mxu0 0.0
    %120 = vmatpush2.msra.mxu0 0.0
    %121 = vmatprep.subr.mxu0 0.0
    %122 = vmatpush2.msra.mxu0 0.0
    %123 = vmatprep.subr.mxu0 0.0
    %124 = vmatpush2.msra.mxu0 0.0
    %125 = vmatprep.subr.mxu0 0.0
    %126 = vmatpush2.msra.mxu0 0.0
    %127 = vmatprep.subr.mxu0 0.0
    %128 = vmatpush2.msra.mxu0 0.0
    %129 = vmatprep.subr.mxu0 0.0
    %130 = vmatpush2.msra.mxu0 0.0
    %131 = vmatprep.subr.mxu0 0.0
    %132 = vmatpush2.msra.mxu0 0.0
    %133 = vmatprep.subr.mxu0 0.0
    %134 = vmatpush2.msra.mxu0 0.0
    %135 = vmatprep.mubr.f32.mxu0 0.0
    %136 = vmatmul.mubr.f32.gmra.mxu0 %v60
    %v137 = vpop.f32.mrf.mxu0
    %v138 = vadd.f32 %v41, %v137
    %v139 = vpop.f32.mrf.mxu0
    %140 = vmatprep.mubr.f32.mxu0 0.0
    %141 = vmatmul.mubr.f32.gmra.mxu0 %v63
    %v142 = vpop.f32.mrf.mxu0
    %v143 = vadd.f32 %v46, %v142
    %v144 = vpop.f32.mrf.mxu0
    %145 = vmatprep.mubr.f32.mxu0 0.0
    %146 = vmatmul.mubr.f32.gmra.mxu0 %v66
    %v147 = vpop.f32.mrf.mxu0
    %v148 = vadd.f32 %v51, %v147
    %v149 = vpop.f32.mrf.mxu0
    %150 = vmatprep.mubr.f32.mxu0 0.0
    %151 = vmatmul.mubr.f32.gmra.mxu0 %v69
    %v152 = vpop.f32.mrf.mxu0
    %v153 = vadd.f32 %v56, %v152
    %v154 = vpop.f32.mrf.mxu0
    %155 = vdwg.mxu0
    %v156 = vmax.f32 %v138, 0.0
    %v157 = vmax.f32 %v143, 0.0
    %v158 = vmax.f32 %v148, 0.0
    %v159 = vmax.f32 %v153, 0.0
    %v160 = vld [vmem:[%s3] sm:$0xff]
    %v161 = vld [vmem:[%s3 + $0x8] sm:$0xff]
    %v162 = vld [vmem:[%s3 + $0x10] sm:$0xff]
    %v163 = vld [vmem:[%s3 + $0x18] sm:$0xff]
    %v164 = vld [vmem:[%s4] sm:$0xff]
    %v165 = vld [vmem:[%s4 + $0x8] sm:$0xff]
    %v166 = vld [vmem:[%s4 + $0x10] sm:$0xff]
    %v167 = vld [vmem:[%s4 + $0x18] sm:$0xff]
    %169 = vset.pattern.permute.xlu0 0
    %170 = vperm.xlu0 %169, %v164
    %v171 = vpop.permute.xlu0 %170
    %174 = vset.pattern.permute.xlu0 0
    %175 = vperm.xlu0 %174, %v165
    %v176 = vpop.permute.xlu0 %175
    %179 = vset.pattern.permute.xlu0 0
    %180 = vperm.xlu0 %179, %v166
    %v181 = vpop.permute.xlu0 %180
    %184 = vset.pattern.permute.xlu0 0
    %185 = vperm.xlu0 %184, %v167
    %v186 = vpop.permute.xlu0 %185
    %vm188 = vcmask 261120
    %v190 = vsel %vm188, %v160, 0
    %v193 = vsel %vm188, %v161, 0
    %v196 = vsel %vm188, %v162, 0
    %v199 = vsel %vm188, %v163, 0
    %201 = vmatprep.subr.mxu0 0.0
    %202 = vmatpush1.msra.mxu0 0.0
    %203 = vmatprep.subr.mxu0 0.0
    %204 = vmatpush1.msra.mxu0 0.0
    %205 = vmatprep.subr.mxu0 0.0
    %206 = vmatpush1.msra.mxu0 0.0
    %207 = vmatprep.subr.mxu0 0.0
    %208 = vmatpush1.msra.mxu0 0.0
    %209 = vmatprep.subr.mxu0 0.0
    %210 = vmatpush1.msra.mxu0 0.0
    %211 = vmatprep.subr.mxu0 0.0
    %212 = vmatpush1.msra.mxu0 0.0
    %213 = vmatprep.subr.mxu0 0.0
    %214 = vmatpush1.msra.mxu0 0.0
    %215 = vmatprep.subr.mxu0 0.0
    %216 = vmatpush1.msra.mxu0 0.0
    %217 = vmatprep.subr.mxu0 0.0
    %218 = vmatpush1.msra.mxu0 0.0
    %219 = vmatprep.subr.mxu0 0.0
    %220 = vmatpush1.msra.mxu0 0.0
    %221 = vmatprep.subr.mxu0 0.0
    %222 = vmatpush1.msra.mxu0 0.0
    %223 = vmatprep.subr.mxu0 0.0
    %224 = vmatpush1.msra.mxu0 0.0
    %225 = vmatprep.subr.mxu0 0.0
    %226 = vmatpush1.msra.mxu0 %v159
    %227 = vmatprep.subr.mxu0 0.0
    %228 = vmatpush1.msra.mxu0 %v158
    %229 = vmatprep.subr.mxu0 0.0
    %230 = vmatpush1.msra.mxu0 %v157
    %231 = vmatprep.subr.mxu0 0.0
    %232 = vmatpush1.msra.mxu0 %v156
    %233 = vmatprep.subr.mxu0 0.0
    %234 = vmatpush2.msra.mxu0 0.0
    %235 = vmatprep.subr.mxu0 0.0
    %236 = vmatpush2.msra.mxu0 0.0
    %237 = vmatprep.subr.mxu0 0.0
    %238 = vmatpush2.msra.mxu0 0.0
    %239 = vmatprep.subr.mxu0 0.0
    %240 = vmatpush2.msra.mxu0 0.0
    %241 = vmatprep.subr.mxu0 0.0
    %242 = vmatpush2.msra.mxu0 0.0
    %243 = vmatprep.subr.mxu0 0.0
    %244 = vmatpush2.msra.mxu0 0.0
    %245 = vmatprep.subr.mxu0 0.0
    %246 = vmatpush2.msra.mxu0 0.0
    %247 = vmatprep.subr.mxu0 0.0
    %248 = vmatpush2.msra.mxu0 0.0
    %249 = vmatprep.subr.mxu0 0.0
    %250 = vmatpush2.msra.mxu0 0.0
    %251 = vmatprep.subr.mxu0 0.0
    %252 = vmatpush2.msra.mxu0 0.0
    %253 = vmatprep.subr.mxu0 0.0
    %254 = vmatpush2.msra.mxu0 0.0
    %255 = vmatprep.subr.mxu0 0.0
    %256 = vmatpush2.msra.mxu0 0.0
    %257 = vmatprep.subr.mxu0 0.0
    %258 = vmatpush2.msra.mxu0 0.0
    %259 = vmatprep.subr.mxu0 0.0
    %260 = vmatpush2.msra.mxu0 0.0
    %261 = vmatprep.subr.mxu0 0.0
    %262 = vmatpush2.msra.mxu0 0.0
    %263 = vmatprep.subr.mxu0 0.0
    %264 = vmatpush2.msra.mxu0 0.0
    %265 = vmatprep.mubr.f32.mxu0 0.0
    %266 = vmatmul.mubr.f32.gmra.mxu0 %v190
    %v267 = vpop.f32.mrf.mxu0
    %v268 = vadd.f32 %v171, %v267
    %v269 = vpop.f32.mrf.mxu0
    %270 = vmatprep.mubr.f32.mxu0 0.0
    %271 = vmatmul.mubr.f32.gmra.mxu0 %v193
    %v272 = vpop.f32.mrf.mxu0
    %v273 = vadd.f32 %v176, %v272
    %v274 = vpop.f32.mrf.mxu0
    %275 = vmatprep.mubr.f32.mxu0 0.0
    %276 = vmatmul.mubr.f32.gmra.mxu0 %v196
    %v277 = vpop.f32.mrf.mxu0
    %v278 = vadd.f32 %v181, %v277
    %v279 = vpop.f32.mrf.mxu0
    %280 = vmatprep.mubr.f32.mxu0 0.0
    %281 = vmatmul.mubr.f32.gmra.mxu0 %v199
    %v282 = vpop.f32.mrf.mxu0
    %v283 = vadd.f32 %v186, %v282
    %v284 = vpop.f32.mrf.mxu0
    %285 = vdwg.mxu0
    %v286 = vmax.f32 %v268, 0.0
    %v287 = vmax.f32 %v273, 0.0
    %v288 = vmax.f32 %v278, 0.0
    %v289 = vmax.f32 %v283, 0.0
    %v290 = vld [vmem:[%s5] sm:$0xff]
    %v291 = vld [vmem:[%s5 + $0x8] sm:$0xff]
    %v292 = vld [vmem:[%s5 + $0x10] sm:$0xff]
    %v293 = vld [vmem:[%s5 + $0x18] sm:$0xff]
    %295 = vset.pattern.permute.xlu0 0
    %296 = vperm.xlu0 %295, %v290
    %v297 = vpop.permute.xlu0 %296
    %300 = vset.pattern.permute.xlu0 0
    %301 = vperm.xlu0 %300, %v291
    %v302 = vpop.permute.xlu0 %301
    %305 = vset.pattern.permute.xlu0 0
    %306 = vperm.xlu0 %305, %v292
    %v307 = vpop.permute.xlu0 %306
    %310 = vset.pattern.permute.xlu0 0
    %311 = vperm.xlu0 %310, %v293
    %v312 = vpop.permute.xlu0 %311
    %v314 = vmul.f32 %v286, %v297
    %v315 = vmul.f32 %v287, %v302
    %v316 = vmul.f32 %v288, %v307
    %v317 = vmul.f32 %v289, %v312
    %v318 = vadd.f32 %v314, %v315
    %v319 = vadd.f32 %v318, %v316
    %v320 = vadd.f32 %v319, %v317
    %v321 = vrot.slane %v320, 4
    %v322 = vadd.f32 %v320, %v321
    %v323 = vrot.slane %v322, 2
    %v324 = vadd.f32 %v322, %v323
    %v325 = vrot.slane %v324, 1
    %v326 = vadd.f32 %v324, %v325
    %s327 = sld [smem:[#allocation2]]
    %v328 = vstv %s327
    %v329 = vadd.f32 %v326, %v328
    %330 = vst [vmem:[#allocation3] sm:$0x1] %v329
    // Predicated region
    $region30: #{fully_connected_forward.1} parent=1 // pred_check
      _
    $region31: #{fully_connected_forward.1} parent=1 // pred_check_branch
      %332 = sbr.rel (0) target = $region33
    $region32: #{fully_connected_forward.1} parent=1 // pred_region
      %s334 = ssub.s32 16, 16
      %335 = vsyncadd [#allocation4], %s334
      %s337 = sshll.u32 [#allocation3], 4
      %s338 = int_to_ptr.vmem [resolvable:$true] %s337
      %340 = dma.vmem_to_hbm [thread:$0]  %s338, 16, %s7, [#allocation4]
    $region33: #{fully_connected_forward.1} parent=1 // pred_fallthru
      _
    // Predicated region
    $region34: #{fully_connected_forward.1} parent=1 // pred_check
      _
    $region35: #{fully_connected_forward.1} parent=1 // pred_check_branch
      %342 = sbr.rel (0) target = $region37
    $region36: #{fully_connected_forward.1} parent=1 // pred_region
      %343 = dma.done [#allocation4], 16
    $region37: #{fully_connected_forward.1} parent=1 // pred_fallthru
      _
    %344 = vsyncpa [#allocation4], 1

</llo_original>
